<compile_context>
chip_gen: v5e
topology: v5e:2x2
jax: 0.10.0
libtpu: 0.0.40
codegen_flags: <defaults>
</compile_context>

<pallas_src>
import numpy as np
import jax
import jax.numpy as jnp
from jax import lax
from jax.experimental import pallas as pl
from jax.experimental.pallas import tpu as pltpu


# ----------------------------------------------------------------------------
# Pallas kernel: one fused QKV projection + softmax attention + residual per image.
# ----------------------------------------------------------------------------
def _make_kernel(C, HW, CQP):
    n_qk = 2 * CQP

    def kernel(x_ref, w_ref, b_ref, gamma_ref, o_ref):
        x = x_ref[0]                                              # (C, HW), compute dtype

        # ---- fused Q/K/V projection: ONE MXU matmul per image --------------------
        # rows [0:CQP) = zero-padded W_q, [CQP:2*CQP) = zero-padded W_k, rest = W_v
        qkv = jnp.dot(w_ref[...], x,
                      preferred_element_type=jnp.float32) + b_ref[...]  # (2*CQP+C, HW)
        q = qkv[:CQP, :]                                          # (CQP, HW)  f32
        k = qkv[CQP:n_qk, :]                                      # (CQP, HW)  f32
        v = qkv[n_qk:, :]                                         # (C,   HW)  f32

        # ---- energy, stored transposed: energy_t[j, i] = sum_c k[c, j] * q[c, i] --
        # (zero-padded q/k rows contribute exactly 0; kept in f32 since exp amplifies)
        energy_t = lax.dot_general(k, q, (((0,), (0,)), ((), ())),
                                   preferred_element_type=jnp.float32)  # (HW_k, HW_q)

        # ---- numerically-stable softmax over keys (axis 0), UNNORMALIZED ----------
        m = jnp.max(energy_t, axis=0, keepdims=True)              # (1, HW_q)
        p_t = jnp.exp(energy_t - m)                               # (HW_k, HW_q)
        denom = jnp.sum(p_t, axis=0, keepdims=True)               # (1, HW_q)

        # ---- plain matmul: out[c, i] = sum_j v[c, j] * p_t[j, i] ------------------
        out = jnp.dot(v.astype(x.dtype), p_t.astype(x.dtype),
                      preferred_element_type=jnp.float32)         # (C, HW_q)

        # ---- deferred softmax norm + gamma folded into one (1, HW) scale + residual
        scale = gamma_ref[0] * pl.reciprocal(denom, approx=True)  # (1, HW_q)
        o_ref[0] = (out * scale + x.astype(jnp.float32)).astype(o_ref.dtype)

    return kernel


def attention_block_pallas(x_nchw, params):
    B, C, H, W = x_nchw.shape
    HW = H * W
    CQP = params["cqp"]
    R = 2 * CQP + C
    compute_dtype = params["wqkv"].dtype

    # Rough VMEM budget for the single-tile (TQ = HW) path: the two (HW, HW) f32 tiles
    # dominate.  Keep it comfortably inside v7x's 64 MiB physical VMEM.
    itemsize = jnp.dtype(compute_dtype).itemsize
    vmem_est = 4 * (2 * HW * HW + (R + C) * HW) + 2 * itemsize * C * HW
    assert vmem_est < 48 * 1024 * 1024, "feature map too large for the single-tile path"
    # TODO(synk): flash-style K/V tiling for larger HW (see header comment).

    x2 = x_nchw.reshape(B, C, HW).astype(compute_dtype)   # free metadata reshape

    kernel = _make_kernel(C, HW, CQP)

    flops = 2 * B * (R * C * HW + CQP * HW * HW + C * HW * HW)
    transcendentals = B * (HW * HW + HW)
    bytes_accessed = (B * C * HW * (itemsize + 4)          # x in (compute dtype), out f32
                      + R * (C * itemsize + 4) + 4)        # fused weights, bias, gamma

    out = pl.pallas_call(
        kernel,
        out_shape=jax.ShapeDtypeStruct((B, C, HW), jnp.float32),
        grid=(B,),
        in_specs=[
            pl.BlockSpec((1, C, HW), lambda b: (b, 0, 0)),        # whole image, lane-dense
            pl.BlockSpec((R, C), lambda b: (0, 0)),               # fused W_qkv (resident)
            pl.BlockSpec((R, 1), lambda b: (0, 0)),               # fused bias
            pl.BlockSpec(memory_space=pltpu.MemorySpace.SMEM),    # gamma scalar
        ],
        out_specs=pl.BlockSpec((1, C, HW), lambda b: (b, 0, 0)),
        compiler_params=pltpu.CompilerParams(
            dimension_semantics=("parallel",)),                   # batch-only parallelism
        cost_estimate=pl.CostEstimate(flops=flops,
                                      transcendentals=transcendentals,
                                      bytes_accessed=bytes_accessed),
    )(x2, params["wqkv"], params["bqkv"], params["gamma"])

    return out.reshape(B, C, H, W)        # free metadata reshape back to NCHW


# ----------------------------------------------------------------------------
# Parameter construction (PyTorch-shaped) and kernel-layout preparation.
# ----------------------------------------------------------------------------
def init_params(key, C):
    assert C % 8 == 0 and C >= 8, "channels // 8 must be >= 1"
    Cq = C // 8
    ks = jax.random.split(key, 6)
    return dict(
        wq=0.2 * jax.random.normal(ks[0], (Cq, C), jnp.float32),
        bq=0.1 * jax.random.normal(ks[1], (Cq,), jnp.float32),
        wk=0.2 * jax.random.normal(ks[2], (Cq, C), jnp.float32),
        bk=0.1 * jax.random.normal(ks[3], (Cq,), jnp.float32),
        wv=0.2 * jax.random.normal(ks[4], (C, C), jnp.float32),
        bv=0.1 * jax.random.normal(ks[5], (C,), jnp.float32),
        # nn.Parameter(torch.zeros(1)) in the module; nonzero so the attention path
        # is actually exercised by the numeric check.
        gamma=jnp.array([0.7], jnp.float32),
    )


def prepare_params(raw, C, compute_dtype=jnp.float32):
    """Fuse W_q/W_k/W_v into one (2*CQP + C, C) weight for a single MXU matmul."""
    Cq = raw["wq"].shape[0]
    CQP = max(8, ((Cq + 7) // 8) * 8)          # pad q/k rows to a sublane multiple
    R = 2 * CQP + C
    w = (jnp.zeros((R, C), jnp.float32)
         .at[:Cq].set(raw["wq"])
         .at[CQP:CQP + Cq].set(raw["wk"])
         .at[2 * CQP:].set(raw["wv"]))
    b = (jnp.zeros((R, 1), jnp.float32)
         .at[:Cq, 0].set(raw["bq"])
         .at[CQP:CQP + Cq, 0].set(raw["bk"])
         .at[2 * CQP:, 0].set(raw["bv"]))
    return dict(wqkv=w.astype(compute_dtype), bqkv=b,
                gamma=raw["gamma"].astype(jnp.float32), cqp=CQP)


# ----------------------------------------------------------------------------
# Pure-JAX reference mirroring the PyTorch forward.
# ----------------------------------------------------------------------------
def ref_forward(x, raw):
    B, C, H, W = x.shape
    HW = H * W

    def conv1x1(w, b):
        return jnp.einsum("oc,bchw->bohw", w, x) + b[None, :, None, None]

    q = conv1x1(raw["wq"], raw["bq"]).reshape(B, -1, HW).transpose(0, 2, 1)  # (B,HW,Cq)
    k = conv1x1(raw["wk"], raw["bk"]).reshape(B, -1, HW)                     # (B,Cq,HW)
    energy = jnp.einsum("bic,bcj->bij", q, k)                                # (B,HW,HW)
    attn = jax.nn.softmax(energy, axis=2)
    v = conv1x1(raw["wv"], raw["bv"]).reshape(B, -1, HW)                     # (B,C,HW)
    out = jnp.einsum("bcj,bij->bci", v, attn).reshape(B, C, H, W)
    return raw["gamma"][0] * out + x


if __name__ == "__main__":
    key = jax.random.PRNGKey(0)
    k_x, k_p = jax.random.split(key)

    # channels must be >= 8 since query/key project to channels // 8
    B, C, H, W = 2, 32, 16, 16
    x = jax.random.normal(k_x, (B, C, H, W), jnp.float32)

    raw = init_params(k_p, C)
    ref = ref_forward(x, raw)

    # f32 matmul operands (approx EUP reciprocal is the only deviation): tight check.
    out_f32 = jax.block_until_ready(
        attention_block_pallas(x, prepare_params(raw, C, jnp.float32)))
    np.testing.assert_allclose(np.asarray(out_f32), np.asarray(ref),
                               rtol=1e-2, atol=1e-2)

    # bf16 matmul operands (v5e/v6e MXU path), f32 accumulation + f32 softmax: relaxed check.
    out_bf16 = jax.block_until_ready(
        attention_block_pallas(x, prepare_params(raw, C, jnp.bfloat16)))
    np.testing.assert_allclose(np.asarray(out_bf16), np.asarray(ref),
                               rtol=5e-2, atol=5e-2)

    print("KERNEL_OK")
</pallas_src>

<mosaic_0001>
module attributes {stable_mosaic.version = 11 : i64} {
  func.func @kernel(%arg0: i32, %arg1: memref<1x32x256xf32, #tpu.memory_space<vmem>>, %arg2: memref<48x32xf32, #tpu.memory_space<vmem>>, %arg3: memref<48x1xf32, #tpu.memory_space<vmem>>, %arg4: memref<1xf32, #tpu.memory_space<smem>>, %arg5: memref<1x32x256xf32, #tpu.memory_space<vmem>>) attributes {dimension_semantics = [#tpu.dimension_semantics<parallel>], iteration_bounds = array<i64: 2>, scalar_prefetch = 0 : i64, scratch_operands = 0 : i64, tpu.core_type = #tpu.core_type<tc>, window_params = [{transform_indices = @transform_0, window_bounds = array<i64: 1, 32, 256>}, {pipeline_mode = #tpu.pipeline_mode<synchronous>, transform_indices = @transform_1, window_bounds = array<i64: 48, 32>}, {pipeline_mode = #tpu.pipeline_mode<synchronous>, transform_indices = @transform_2, window_bounds = array<i64: 48, 1>}, {transform_indices = @transform_3, window_bounds = array<i64: 1>}, {transform_indices = @transform_4, window_bounds = array<i64: 1, 32, 256>}]} {
    %c0 = arith.constant 0 : index
    %c0_0 = arith.constant 0 : index
    %c0_1 = arith.constant 0 : index
    %0 = vector.load %arg1[%c0, %c0_0, %c0_1] : memref<1x32x256xf32, #tpu.memory_space<vmem>>, vector<1x32x256xf32>
    %1 = vector.shape_cast %0 : vector<1x32x256xf32> to vector<32x256xf32>
    %c0_2 = arith.constant 0 : index
    %c0_3 = arith.constant 0 : index
    %2 = vector.load %arg2[%c0_2, %c0_3] : memref<48x32xf32, #tpu.memory_space<vmem>>, vector<48x32xf32>
    %cst = arith.constant dense<0.000000e+00> : vector<48x256xf32>
    %3 = tpu.matmul %2, %1, %cst {dimension_numbers = #tpu.dot_dimension_numbers<[1], [0], [0], [1], [0, 0, 1, 1], [], []>} : vector<48x32xf32>, vector<32x256xf32>, vector<48x256xf32> -> vector<48x256xf32>
    %c0_4 = arith.constant 0 : index
    %c0_5 = arith.constant 0 : index
    %4 = vector.load %arg3[%c0_4, %c0_5] : memref<48x1xf32, #tpu.memory_space<vmem>>, vector<48x1xf32>
    %5 = vector.broadcast %4 : vector<48x1xf32> to vector<48x256xf32>
    %6 = arith.addf %3, %5 : vector<48x256xf32>
    %7 = vector.extract_strided_slice %6 {offsets = [0, 0], sizes = [8, 256], strides = [1, 1]} : vector<48x256xf32> to vector<8x256xf32>
    %8 = vector.extract_strided_slice %6 {offsets = [8, 0], sizes = [8, 256], strides = [1, 1]} : vector<48x256xf32> to vector<8x256xf32>
    %9 = vector.extract_strided_slice %6 {offsets = [16, 0], sizes = [32, 256], strides = [1, 1]} : vector<48x256xf32> to vector<32x256xf32>
    %cst_6 = arith.constant dense<0.000000e+00> : vector<256x256xf32>
    %10 = tpu.matmul %8, %7, %cst_6 {dimension_numbers = #tpu.dot_dimension_numbers<[0], [0], [1], [1], [0, 1, 1, 1], [], []>} : vector<8x256xf32>, vector<8x256xf32>, vector<256x256xf32> -> vector<256x256xf32>
    %cst_7 = arith.constant dense<0xFF800000> : vector<256xf32>
    %11 = vector.multi_reduction <maximumf>, %10, %cst_7 [0] : vector<256x256xf32> to vector<256xf32>
    %12 = vector.shape_cast %11 : vector<256xf32> to vector<1x256xf32>
    %13 = vector.broadcast %12 : vector<1x256xf32> to vector<256x256xf32>
    %14 = arith.subf %10, %13 : vector<256x256xf32>
    %15 = math.exp %14 : vector<256x256xf32>
    %cst_8 = arith.constant dense<0.000000e+00> : vector<256xf32>
    %16 = vector.multi_reduction <add>, %15, %cst_8 [0] : vector<256x256xf32> to vector<256xf32>
    %17 = vector.shape_cast %16 : vector<256xf32> to vector<1x256xf32>
    %cst_9 = arith.constant dense<0.000000e+00> : vector<32x256xf32>
    %18 = tpu.matmul %9, %15, %cst_9 {dimension_numbers = #tpu.dot_dimension_numbers<[1], [0], [0], [1], [0, 0, 1, 1], [], []>} : vector<32x256xf32>, vector<256x256xf32>, vector<32x256xf32> -> vector<32x256xf32>
    %c0_10 = arith.constant 0 : index
    %19 = memref.load %arg4[%c0_10] : memref<1xf32, #tpu.memory_space<smem>>
    %20 = tpu.reciprocal %17 {approx = true} : vector<1x256xf32> -> vector<1x256xf32>
    %21 = vector.broadcast %19 : f32 to vector<1x256xf32>
    %22 = arith.mulf %21, %20 : vector<1x256xf32>
    %23 = vector.broadcast %22 : vector<1x256xf32> to vector<32x256xf32>
    %24 = arith.mulf %18, %23 : vector<32x256xf32>
    %25 = arith.addf %24, %1 : vector<32x256xf32>
    %c0_11 = arith.constant 0 : index
    %c0_12 = arith.constant 0 : index
    %c0_13 = arith.constant 0 : index
    %26 = vector.load %arg5[%c0_11, %c0_12, %c0_13] : memref<1x32x256xf32, #tpu.memory_space<vmem>>, vector<1x32x256xf32>
    %27 = vector.shape_cast %26 : vector<1x32x256xf32> to vector<32x256xf32>
    %28 = vector.shape_cast %25 : vector<32x256xf32> to vector<1x32x256xf32>
    tpu.vector_store %arg5[%c0_11, %c0_12, %c0_13], %28 {strides = array<i32>} : memref<1x32x256xf32, #tpu.memory_space<vmem>>, vector<1x32x256xf32>,
    return
  }
  func.func @transform_0(%arg0: i32) -> (i32, i32, i32) {
    %c0_i32 = arith.constant 0 : i32
    %c0_i32_0 = arith.constant 0 : i32
    %c0_i32_1 = arith.constant 0 : i32
    return %arg0, %c0_i32, %c0_i32_0 : i32, i32, i32
  }
  func.func @transform_1(%arg0: i32) -> (i32, i32) {
    %c0_i32 = arith.constant 0 : i32
    %c0_i32_0 = arith.constant 0 : i32
    %c0_i32_1 = arith.constant 0 : i32
    return %c0_i32, %c0_i32_0 : i32, i32
  }
  func.func @transform_2(%arg0: i32) -> (i32, i32) {
    %c0_i32 = arith.constant 0 : i32
    %c0_i32_0 = arith.constant 0 : i32
    %c0_i32_1 = arith.constant 0 : i32
    return %c0_i32, %c0_i32_0 : i32, i32
  }
  func.func @transform_3(%arg0: i32) -> i32 {
    %c0_i32 = arith.constant 0 : i32
    %c0_i32_0 = arith.constant 0 : i32
    return %c0_i32 : i32
  }
  func.func @transform_4(%arg0: i32) -> (i32, i32, i32) {
    %c0_i32 = arith.constant 0 : i32
    %c0_i32_0 = arith.constant 0 : i32
    %c0_i32_1 = arith.constant 0 : i32
    return %arg0, %c0_i32, %c0_i32_0 : i32, i32, i32
  }
}

</mosaic_0001>

<llo_original>
// kernel: tpu_custom_call.1
$region0: #{tpu_custom_call.1}
  #allocation0 [shape = 'u32[]', space=smem, size = 0x4, offset = 0x4, fixed_abs, tag = 'smem constant byte address 0x4 - core index']
  #allocation1 [shape = 'u32[72,128]{1,0:T(1,128)}', space=vmem, size = 0x9000, scoped, tag = 'internal scratch']
  #allocation2 [shape = 'f32[1]{0:T(128)S(6)}', space=smem, size = 0x200, scoped, tag = 'scoped memory for tpu_custom_call.1']
  %s0 = inlined_call_operand.vmem [shape: f32[2,32,256], index: 0, kind: input, shape index: {}]
  %s1 = inlined_call_operand.vmem [shape: f32[48,32], index: 1, kind: input, shape index: {}]
  %s2 = inlined_call_operand.vmem [shape: f32[48,1], index: 2, kind: input, shape index: {}]
  %s3 = inlined_call_operand.<no memory space> [shape: f32[1], index: 3, kind: input, shape index: {}]
  %s4 = inlined_call_operand.hbm [shape: f32[2,32,256], index: 4, kind: output, shape index: {}]
  %s5 = sld [smem:[#allocation0]]
  $region49: #{tpu_custom_call.1} parent=0
    _
  %s7 = ssub.s32 1, %s5
  %s8 = scalar_select 0, %s7, %s5
  %9 = sst [smem:[#allocation2]] %s3
  $region1: #{tpu_custom_call.1} parent=0
    #allocation3 [shape = 'u8[65536]{0}', space=vmem, size = 0x10000, scoped, tag = 'output window, operand 0']
    #allocation4 [shape = 's32[2]{0}', space=sflag, size = 0x8, scoped, tag = 'scoped memory for tpu_custom_call.1']
    %10 = vsyncpa [#allocation4], 0
    %s11 = scalar_lea.sflag [#allocation4], 1
    %12 = vsyncpa %s11, 0
    loop: start=0, step=1, limit=4
    $region2: #{tpu_custom_call.1} parent=1 // loop_pre_header
      _
    $region3: #{tpu_custom_call.1} parent=1 // loop_header
      %s14 = sphi 0, %s18
      %p15 = scmp.ge.s32.totalorder %s14, 4
      %s24 = sphi 0, %s26
      %s27 = sphi 0, %s24
      %s28 = sphi 0, %s27
      %s44 = sphi 0, %s28
      %s48 = sphi 0, %s48
      %s50 = sphi 0, %s48
      %s51 = sphi 0, %s50
      %s65 = sphi 0, %s51
      %s69 = sphi 0, %s69
      %s71 = sphi 0, %s69
      %s72 = sphi 0, %s71
      %s86 = sphi 0, %s72
      %s90 = sphi 0, %s90
      %s92 = sphi 0, %s90
      %s93 = sphi 0, %s92
      %s107 = sphi 0, %s93
      %s113 = sphi 0, %s115
      %s116 = sphi 0, %s113
      %s117 = sphi 0, %s116
      %s133 = sphi 0, %s117
    $region4: #{tpu_custom_call.1} parent=1 // loop_header_branch
      %17 = sbr.rel (%p15) target = $region8
    $region5: #{tpu_custom_call.1} parent=1 // loop_body
      %s19 = ssub.s32 %s14, 1
      %s20 = ssub.s32 %s14, 2
      %s21 = sadd.s32 %s14, 1
      %s22 = ssub.s32 %s14, %s21
      %p23 = scmp.eq.s32.totalorder %s22, 0
      %s25 = sadd.s32 %s24, 1
      %s26 = scalar_select %p23, %s24, %s25
      %p29 = pneg %p23
      %p30 = scmp.eq.s32.totalorder %s14, 1
      %p31 = por %p29, %p30
      %p32 = scmp.ne.s32.totalorder %s24, %s27
      %p33 = scmp.eq.s32.totalorder %s14, 0
      %p34 = por %p32, %p33
      %p35 = scmp.ne.s32.totalorder %s24, %s27
      %p36 = scmp.eq.s32.totalorder %s19, 1
      %p37 = por %p35, %p36
      %p38 = scmp.ne.s32.totalorder %s27, %s28
      %p39 = scmp.eq.s32.totalorder %s19, 0
      %p40 = por %p38, %p39
      %p41 = scmp.ne.s32.totalorder %s27, %s28
      %p42 = scmp.eq.s32.totalorder %s20, 1
      %p43 = por %p41, %p42
      %p45 = scmp.ne.s32.totalorder %s28, %s44
      %p46 = scmp.eq.s32.totalorder %s20, 0
      %p47 = por %p45, %p46
      %s49 = sadd.s32 %s48, 1
      %p52 = scmp.eq.s32.totalorder %s14, 1
      %p53 = scmp.ne.s32.totalorder %s48, %s50
      %p54 = scmp.eq.s32.totalorder %s14, 0
      %p55 = por %p53, %p54
      %p56 = scmp.ne.s32.totalorder %s48, %s50
      %p57 = scmp.eq.s32.totalorder %s19, 1
      %p58 = por %p56, %p57
      %p59 = scmp.ne.s32.totalorder %s50, %s51
      %p60 = scmp.eq.s32.totalorder %s19, 0
      %p61 = por %p59, %p60
      %p62 = scmp.ne.s32.totalorder %s50, %s51
      %p63 = scmp.eq.s32.totalorder %s20, 1
      %p64 = por %p62, %p63
      %p66 = scmp.ne.s32.totalorder %s51, %s65
      %p67 = scmp.eq.s32.totalorder %s20, 0
      %p68 = por %p66, %p67
      %s70 = sadd.s32 %s69, 1
      %p73 = scmp.eq.s32.totalorder %s14, 1
      %p74 = scmp.ne.s32.totalorder %s69, %s71
      %p75 = scmp.eq.s32.totalorder %s14, 0
      %p76 = por %p74, %p75
      %p77 = scmp.ne.s32.totalorder %s69, %s71
      %p78 = scmp.eq.s32.totalorder %s19, 1
      %p79 = por %p77, %p78
      %p80 = scmp.ne.s32.totalorder %s71, %s72
      %p81 = scmp.eq.s32.totalorder %s19, 0
      %p82 = por %p80, %p81
      %p83 = scmp.ne.s32.totalorder %s71, %s72
      %p84 = scmp.eq.s32.totalorder %s20, 1
      %p85 = por %p83, %p84
      %p87 = scmp.ne.s32.totalorder %s72, %s86
      %p88 = scmp.eq.s32.totalorder %s20, 0
      %p89 = por %p87, %p88
      %s91 = sadd.s32 %s90, 1
      %p94 = scmp.eq.s32.totalorder %s14, 1
      %p95 = scmp.ne.s32.totalorder %s90, %s92
      %p96 = scmp.eq.s32.totalorder %s14, 0
      %p97 = por %p95, %p96
      %p98 = scmp.ne.s32.totalorder %s90, %s92
      %p99 = scmp.eq.s32.totalorder %s19, 1
      %p100 = por %p98, %p99
      %p101 = scmp.ne.s32.totalorder %s92, %s93
      %p102 = scmp.eq.s32.totalorder %s19, 0
      %p103 = por %p101, %p102
      %p104 = scmp.ne.s32.totalorder %s92, %s93
      %p105 = scmp.eq.s32.totalorder %s20, 1
      %p106 = por %p104, %p105
      %p108 = scmp.ne.s32.totalorder %s93, %s107
      %p109 = scmp.eq.s32.totalorder %s20, 0
      %p110 = por %p108, %p109
      %s111 = ssub.s32 %s14, %s21
      %p112 = scmp.eq.s32.totalorder %s111, 0
      %s114 = sadd.s32 %s113, 1
      %s115 = scalar_select %p112, %s113, %s114
      %p118 = pneg %p112
      %p119 = scmp.eq.s32.totalorder %s14, 1
      %p120 = por %p118, %p119
      %p121 = scmp.ne.s32.totalorder %s113, %s116
      %p122 = scmp.eq.s32.totalorder %s14, 0
      %p123 = por %p121, %p122
      %p124 = scmp.ne.s32.totalorder %s113, %s116
      %p125 = scmp.eq.s32.totalorder %s19, 1
      %p126 = por %p124, %p125
      %p127 = scmp.ne.s32.totalorder %s116, %s117
      %p128 = scmp.eq.s32.totalorder %s19, 0
      %p129 = por %p127, %p128
      %p130 = scmp.ne.s32.totalorder %s116, %s117
      %p131 = scmp.eq.s32.totalorder %s20, 1
      %p132 = por %p130, %p131
      %p134 = scmp.ne.s32.totalorder %s117, %s133
      %p135 = scmp.eq.s32.totalorder %s20, 0
      %p136 = por %p134, %p135
      %p137 = scmp.le.s32.totalorder 1, %s14
      %p138 = scmp.lt.s32.totalorder %s14, 3
      %p139 = pnand %p137, %p138
      %p140 = pneg %p139
      // Predicated region
      $region9: #{tpu_custom_call.1} parent=5 // pred_check
        _
      $region10: #{tpu_custom_call.1} parent=5 // pred_check_branch
        %142 = sbr.rel (%p139) target = $region12
      $region11: #{tpu_custom_call.1} parent=5 // pred_region
        %s143 = ssub.s32 %s14, 1
        // Predicated region
        $region13: #{tpu_custom_call.1} parent=11 // pred_check
          %p144 = pneg %p61
        $region14: #{tpu_custom_call.1} parent=11 // pred_check_branch
          %146 = sbr.rel (%p144) target = $region16
        $region15: #{tpu_custom_call.1} parent=11 // pred_region
          _
        $region16: #{tpu_custom_call.1} parent=11 // pred_fallthru
          _
        // Predicated region
        $region17: #{tpu_custom_call.1} parent=11 // pred_check
          %p147 = pneg %p82
        $region18: #{tpu_custom_call.1} parent=11 // pred_check_branch
          %149 = sbr.rel (%p147) target = $region20
        $region19: #{tpu_custom_call.1} parent=11 // pred_region
          _
        $region20: #{tpu_custom_call.1} parent=11 // pred_fallthru
          _
        // Predicated region
        $region21: #{tpu_custom_call.1} parent=11 // pred_check
          %p150 = pneg %p103
        $region22: #{tpu_custom_call.1} parent=11 // pred_check_branch
          %152 = sbr.rel (%p150) target = $region24
        $region23: #{tpu_custom_call.1} parent=11 // pred_region
          _
        $region24: #{tpu_custom_call.1} parent=11 // pred_fallthru
          _
      $region12: #{tpu_custom_call.1} parent=5 // pred_fallthru
        _
      %p153 = scmp.lt.s32.totalorder %s14, 2
      // Predicated region
      $region25: #{tpu_custom_call.1} parent=5 // pred_check
        %p154 = pneg %p153
      $region26: #{tpu_custom_call.1} parent=5 // pred_check_branch
        %156 = sbr.rel (%p154) target = $region28
      $region27: #{tpu_custom_call.1} parent=5 // pred_region
        // Predicated region
        $region29: #{tpu_custom_call.1} parent=27 // pred_check
          %p157 = pneg %p34
        $region30: #{tpu_custom_call.1} parent=27 // pred_check_branch
          %159 = sbr.rel (%p157) target = $region32
        $region31: #{tpu_custom_call.1} parent=27 // pred_region
          %p160 = scmp.lt.s32.totalorder %s14, 1
          %s161 = scalar_select %p160, %s14, 1
          %s162 = smul.addr %s161, 8
          %s163 = smul.addr %s162, 8
          %s164 = scalar_lea.vmem %s0, %s163
        $region32: #{tpu_custom_call.1} parent=27 // pred_fallthru
          _
      $region28: #{tpu_custom_call.1} parent=5 // pred_fallthru
        _
      %p165 = scmp.le.s32.totalorder 1, %s14
      %p166 = scmp.lt.s32.totalorder %s14, 3
      %p167 = pnand %p165, %p166
      %p168 = pneg %p167
      // Predicated region
      $region33: #{tpu_custom_call.1} parent=5 // pred_check
        _
      $region34: #{tpu_custom_call.1} parent=5 // pred_check_branch
        %170 = sbr.rel (%p167) target = $region36
      $region35: #{tpu_custom_call.1} parent=5 // pred_region
        %s171 = ssub.s32 %s14, 1
        %p172 = scmp.lt.s32.totalorder %s19, 1
        %s173 = scalar_select %p172, %s19, 1
        %s174 = smul.addr %s173, 8
        %s175 = smul.addr %s174, 8
        %s176 = scalar_lea.vmem %s0, %s175
        %p177 = pneg %p40
        %p178 = pneg %p37
        %p179 = pneg %p61
        %p180 = pneg %p58
        %p181 = pneg %p82
        %p182 = pneg %p79
        %p183 = pneg %p103
        %p184 = pneg %p100
        %p185 = pneg %p129
        %p186 = pneg %p126
        %s187 = sand.u32 %s116, 1
        %s188 = scalar_lea.sflag [#allocation4], %s187
        %s189 = sand.u32 %s116, 1
        %s190 = smul.addr %s189, 64
        %s191 = scalar_lea.vmem [#allocation3], %s190
        %p192 = scmp.lt.s32.totalorder %s19, 1
        %s193 = scalar_select %p192, %s19, 1
        %s194 = smul.addr %s193, 8
        %s195 = smul.addr %s194, 8
        %s196 = scalar_lea.vmem %s0, %s195
        %v197 = vld [vmem:[%s196] sm:$0xff]
        %v198 = vld [vmem:[%s196 + $0x8] sm:$0xff]
        %v199 = vld [vmem:[%s196 + $0x10] sm:$0xff]
        %v200 = vld [vmem:[%s196 + $0x18] sm:$0xff]
        %v201 = vld [vmem:[%s196 + $0x20] sm:$0xff]
        %v202 = vld [vmem:[%s196 + $0x28] sm:$0xff]
        %v203 = vld [vmem:[%s196 + $0x30] sm:$0xff]
        %v204 = vld [vmem:[%s196 + $0x38] sm:$0xff]
        %v205 = vld [vmem:[%s1] sm:$0xff]
        %v206 = vld [vmem:[%s1 + $0x8] sm:$0xff]
        %v207 = vld [vmem:[%s1 + $0x10] sm:$0xff]
        %v208 = vld [vmem:[%s1 + $0x18] sm:$0xff]
        %v209 = vld [vmem:[%s1 + $0x20] sm:$0xff]
        %v210 = vld [vmem:[%s1 + $0x28] sm:$0xff]
        %v211 = vld [vmem:[%s2] sm:$0xff]
        %v212 = vld [vmem:[%s2 + $0x8] sm:$0xff]
        %v213 = vld [vmem:[%s2 + $0x10] sm:$0xff]
        %v214 = vld [vmem:[%s2 + $0x18] sm:$0xff]
        %v215 = vld [vmem:[%s2 + $0x20] sm:$0xff]
        %v216 = vld [vmem:[%s2 + $0x28] sm:$0xff]
        %218 = vset.pattern.permute.xlu0 0
        %219 = vperm.xlu0 %218, %v211
        %v220 = vpop.permute.xlu0 %219
        %223 = vset.pattern.permute.xlu0 0
        %224 = vperm.xlu0 %223, %v212
        %v225 = vpop.permute.xlu0 %224
        %228 = vset.pattern.permute.xlu0 0
        %229 = vperm.xlu0 %228, %v213
        %v230 = vpop.permute.xlu0 %229
        %233 = vset.pattern.permute.xlu0 0
        %234 = vperm.xlu0 %233, %v214
        %v235 = vpop.permute.xlu0 %234
        %238 = vset.pattern.permute.xlu0 0
        %239 = vperm.xlu0 %238, %v215
        %v240 = vpop.permute.xlu0 %239
        %243 = vset.pattern.permute.xlu0 0
        %244 = vperm.xlu0 %243, %v216
        %v245 = vpop.permute.xlu0 %244
        %vm247 = vcmask 261120
        %v249 = vsel %vm247, %v205, 0
        %v252 = vsel %vm247, %v206, 0
        %v255 = vsel %vm247, %v207, 0
        %v258 = vsel %vm247, %v208, 0
        %v261 = vsel %vm247, %v209, 0
        %v264 = vsel %vm247, %v210, 0
        %266 = vmatpush.msra.mxu0 0.0
        %267 = vmatpush.msra.mxu0 0.0
        %268 = vmatpush.msra.mxu0 0.0
        %269 = vmatpush.msra.mxu0 0.0
        %270 = vmatpush.msra.mxu0 0.0
        %271 = vmatpush.msra.mxu0 0.0
        %272 = vmatpush.msra.mxu0 0.0
        %273 = vmatpush.msra.mxu0 0.0
        %274 = vmatpush.msra.mxu0 0.0
        %275 = vmatpush.msra.mxu0 0.0
        %276 = vmatpush.msra.mxu0 0.0
        %277 = vmatpush.msra.mxu0 0.0
        %278 = vmatpush.msra.mxu0 %v203
        %279 = vmatpush.msra.mxu0 %v201
        %280 = vmatpush.msra.mxu0 %v199
        %281 = vmatpush.msra.mxu0 %v197
        %282 = vmatmul.f32.gmra.mxu0 %v249
        %v283 = vpop.f32.mrf.mxu0
        %v284 = vadd.f32 %v220, %v283
        %285 = vmatmul.f32.gmra.mxu0 %v252
        %v286 = vpop.f32.mrf.mxu0
        %v287 = vadd.f32 %v225, %v286
        %288 = vmatmul.f32.gmra.mxu0 %v255
        %v289 = vpop.f32.mrf.mxu0
        %v290 = vadd.f32 %v230, %v289
        %291 = vmatmul.f32.gmra.mxu0 %v258
        %v292 = vpop.f32.mrf.mxu0
        %v293 = vadd.f32 %v235, %v292
        %294 = vmatmul.f32.gmra.mxu0 %v261
        %v295 = vpop.f32.mrf.mxu0
        %v296 = vadd.f32 %v240, %v295
        %297 = vmatmul.f32.gmra.mxu0 %v264
        %v298 = vpop.f32.mrf.mxu0
        %v299 = vadd.f32 %v245, %v298
        %300 = vdwg.mxu0
        %301 = vmatpush.msra.mxu0 0.0
        %302 = vmatpush.msra.mxu0 0.0
        %303 = vmatpush.msra.mxu0 0.0
        %304 = vmatpush.msra.mxu0 0.0
        %305 = vmatpush.msra.mxu0 0.0
        %306 = vmatpush.msra.mxu0 0.0
        %307 = vmatpush.msra.mxu0 0.0
        %308 = vmatpush.msra.mxu0 0.0
        %309 = vmatpush.msra.mxu0 0.0
        %310 = vmatpush.msra.mxu0 0.0
        %311 = vmatpush.msra.mxu0 0.0
        %312 = vmatpush.msra.mxu0 0.0
        %313 = vmatpush.msra.mxu0 %v204
        %314 = vmatpush.msra.mxu0 %v202
        %315 = vmatpush.msra.mxu0 %v200
        %316 = vmatpush.msra.mxu0 %v198
        %317 = vmatmul.f32.gmra.mxu0 %v249
        %v318 = vpop.f32.mrf.mxu0
        %v319 = vadd.f32 %v220, %v318
        %320 = vmatmul.f32.gmra.mxu0 %v252
        %v321 = vpop.f32.mrf.mxu0
        %v322 = vadd.f32 %v225, %v321
        %323 = vmatmul.f32.gmra.mxu0 %v255
        %v324 = vpop.f32.mrf.mxu0
        %v325 = vadd.f32 %v230, %v324
        %326 = vmatmul.f32.gmra.mxu0 %v258
        %v327 = vpop.f32.mrf.mxu0
        %v328 = vadd.f32 %v235, %v327
        %329 = vmatmul.f32.gmra.mxu0 %v261
        %v330 = vpop.f32.mrf.mxu0
        %v331 = vadd.f32 %v240, %v330
        %332 = vmatmul.f32.gmra.mxu0 %v264
        %v333 = vpop.f32.mrf.mxu0
        %v334 = vadd.f32 %v245, %v333
        %335 = vdwg.mxu0
        %336 = vxpose.xlu0.b32.start [1/16] %v287, 128
        %337 = vxpose.xlu0.b32.cont [2/16] 0.0, 128
        %338 = vxpose.xlu0.b32.cont [3/16] 0.0, 128
        %339 = vxpose.xlu0.b32.cont [4/16] 0.0, 128
        %340 = vxpose.xlu0.b32.cont [5/16] 0.0, 128
        %341 = vxpose.xlu0.b32.cont [6/16] 0.0, 128
        %342 = vxpose.xlu0.b32.cont [7/16] 0.0, 128
        %343 = vxpose.xlu0.b32.cont [8/16] 0.0, 128
        %344 = vxpose.xlu0.b32.cont [9/16] 0.0, 128
        %345 = vxpose.xlu0.b32.cont [10/16] 0.0, 128
        %346 = vxpose.xlu0.b32.cont [11/16] 0.0, 128
        %347 = vxpose.xlu0.b32.cont [12/16] 0.0, 128
        %348 = vxpose.xlu0.b32.cont [13/16] 0.0, 128
        %349 = vxpose.xlu0.b32.cont [14/16] 0.0, 128
        %350 = vxpose.xlu0.b32.cont [15/16] 0.0, 128
        %351 = vxpose.xlu0.b32.end [16/16] 0.0, 128
        %v352 = vpop.trf.xlu0
        %v353 = vpop.trf.xlu0
        %v354 = vpop.trf.xlu0
        %v355 = vpop.trf.xlu0
        %v356 = vpop.trf.xlu0
        %v357 = vpop.trf.xlu0
        %v358 = vpop.trf.xlu0
        %v359 = vpop.trf.xlu0
        %v360 = vpop.trf.xlu0
        %v361 = vpop.trf.xlu0
        %v362 = vpop.trf.xlu0
        %v363 = vpop.trf.xlu0
        %v364 = vpop.trf.xlu0
        %v365 = vpop.trf.xlu0
        %v366 = vpop.trf.xlu0
        %v367 = vpop.trf.xlu0
        %368 = vxpose.xlu0.b32.start [1/16] %v322, 128
        %369 = vxpose.xlu0.b32.cont [2/16] 0.0, 128
        %370 = vxpose.xlu0.b32.cont [3/16] 0.0, 128
        %371 = vxpose.xlu0.b32.cont [4/16] 0.0, 128
        %372 = vxpose.xlu0.b32.cont [5/16] 0.0, 128
        %373 = vxpose.xlu0.b32.cont [6/16] 0.0, 128
        %374 = vxpose.xlu0.b32.cont [7/16] 0.0, 128
        %375 = vxpose.xlu0.b32.cont [8/16] 0.0, 128
        %376 = vxpose.xlu0.b32.cont [9/16] 0.0, 128
        %377 = vxpose.xlu0.b32.cont [10/16] 0.0, 128
        %378 = vxpose.xlu0.b32.cont [11/16] 0.0, 128
        %379 = vxpose.xlu0.b32.cont [12/16] 0.0, 128
        %380 = vxpose.xlu0.b32.cont [13/16] 0.0, 128
        %381 = vxpose.xlu0.b32.cont [14/16] 0.0, 128
        %382 = vxpose.xlu0.b32.cont [15/16] 0.0, 128
        %383 = vxpose.xlu0.b32.end [16/16] 0.0, 128
        %v384 = vpop.trf.xlu0
        %v385 = vpop.trf.xlu0
        %v386 = vpop.trf.xlu0
        %v387 = vpop.trf.xlu0
        %v388 = vpop.trf.xlu0
        %v389 = vpop.trf.xlu0
        %v390 = vpop.trf.xlu0
        %v391 = vpop.trf.xlu0
        %v392 = vpop.trf.xlu0
        %v393 = vpop.trf.xlu0
        %v394 = vpop.trf.xlu0
        %v395 = vpop.trf.xlu0
        %v396 = vpop.trf.xlu0
        %v397 = vpop.trf.xlu0
        %v398 = vpop.trf.xlu0
        %v399 = vpop.trf.xlu0
        %vm400 = vcmask 64512
        %v402 = vsel %vm400, %v352, 0
        %v405 = vsel %vm400, %v353, 0
        %v408 = vsel %vm400, %v354, 0
        %v411 = vsel %vm400, %v355, 0
        %v414 = vsel %vm400, %v356, 0
        %v417 = vsel %vm400, %v357, 0
        %v420 = vsel %vm400, %v358, 0
        %v423 = vsel %vm400, %v359, 0
        %v426 = vsel %vm400, %v360, 0
        %v429 = vsel %vm400, %v361, 0
        %v432 = vsel %vm400, %v362, 0
        %v435 = vsel %vm400, %v363, 0
        %v438 = vsel %vm400, %v364, 0
        %v441 = vsel %vm400, %v365, 0
        %v444 = vsel %vm400, %v366, 0
        %v447 = vsel %vm400, %v367, 0
        %v450 = vsel %vm400, %v384, 0
        %v453 = vsel %vm400, %v385, 0
        %v456 = vsel %vm400, %v386, 0
        %v459 = vsel %vm400, %v387, 0
        %v462 = vsel %vm400, %v388, 0
        %v465 = vsel %vm400, %v389, 0
        %v468 = vsel %vm400, %v390, 0
        %v471 = vsel %vm400, %v391, 0
        %v474 = vsel %vm400, %v392, 0
        %v477 = vsel %vm400, %v393, 0
        %v480 = vsel %vm400, %v394, 0
        %v483 = vsel %vm400, %v395, 0
        %v486 = vsel %vm400, %v396, 0
        %v489 = vsel %vm400, %v397, 0
        %v492 = vsel %vm400, %v398, 0
        %v495 = vsel %vm400, %v399, 0
        %497 = vmatpush.msra.mxu0 0.0
        %498 = vmatpush.msra.mxu0 0.0
        %499 = vmatpush.msra.mxu0 0.0
        %500 = vmatpush.msra.mxu0 0.0
        %501 = vmatpush.msra.mxu0 0.0
        %502 = vmatpush.msra.mxu0 0.0
        %503 = vmatpush.msra.mxu0 0.0
        %504 = vmatpush.msra.mxu0 0.0
        %505 = vmatpush.msra.mxu0 0.0
        %506 = vmatpush.msra.mxu0 0.0
        %507 = vmatpush.msra.mxu0 0.0
        %508 = vmatpush.msra.mxu0 0.0
        %509 = vmatpush.msra.mxu0 0.0
        %510 = vmatpush.msra.mxu0 0.0
        %511 = vmatpush.msra.mxu0 0.0
        %512 = vmatpush.msra.mxu0 %v284
        %513 = vmatmul.f32.gmra.mxu0 %v402
        %v514 = vpop.f32.mrf.mxu0
        %v515 = vadd.f32 0.0, %v514
        %516 = vmatmul.f32.gmra.mxu0 %v405
        %v517 = vpop.f32.mrf.mxu0
        %v518 = vadd.f32 0.0, %v517
        %519 = vmatmul.f32.gmra.mxu0 %v408
        %v520 = vpop.f32.mrf.mxu0
        %v521 = vadd.f32 0.0, %v520
        %522 = vmatmul.f32.gmra.mxu0 %v411
        %v523 = vpop.f32.mrf.mxu0
        %v524 = vadd.f32 0.0, %v523
        %525 = vmatmul.f32.gmra.mxu0 %v414
        %v526 = vpop.f32.mrf.mxu0
        %v527 = vadd.f32 0.0, %v526
        %528 = vmatmul.f32.gmra.mxu0 %v417
        %v529 = vpop.f32.mrf.mxu0
        %v530 = vadd.f32 0.0, %v529
        %531 = vmatmul.f32.gmra.mxu0 %v420
        %v532 = vpop.f32.mrf.mxu0
        %v533 = vadd.f32 0.0, %v532
        %534 = vmatmul.f32.gmra.mxu0 %v423
        %v535 = vpop.f32.mrf.mxu0
        %v536 = vadd.f32 0.0, %v535
        %537 = vmatmul.f32.gmra.mxu0 %v426
        %v538 = vpop.f32.mrf.mxu0
        %v539 = vadd.f32 0.0, %v538
        %540 = vmatmul.f32.gmra.mxu0 %v429
        %v541 = vpop.f32.mrf.mxu0
        %v542 = vadd.f32 0.0, %v541
        %543 = vmatmul.f32.gmra.mxu0 %v432
        %v544 = vpop.f32.mrf.mxu0
        %v545 = vadd.f32 0.0, %v544
        %546 = vmatmul.f32.gmra.mxu0 %v435
        %v547 = vpop.f32.mrf.mxu0
        %v548 = vadd.f32 0.0, %v547
        %549 = vmatmul.f32.gmra.mxu0 %v438
        %v550 = vpop.f32.mrf.mxu0
        %v551 = vadd.f32 0.0, %v550
        %552 = vmatmul.f32.gmra.mxu0 %v441
        %v553 = vpop.f32.mrf.mxu0
        %v554 = vadd.f32 0.0, %v553
        %555 = vmatmul.f32.gmra.mxu0 %v444
        %v556 = vpop.f32.mrf.mxu0
        %v557 = vadd.f32 0.0, %v556
        %558 = vmatmul.f32.gmra.mxu0 %v447
        %v559 = vpop.f32.mrf.mxu0
        %v560 = vadd.f32 0.0, %v559
        %561 = vmatmul.f32.gmra.mxu0 %v450
        %v562 = vpop.f32.mrf.mxu0
        %v563 = vadd.f32 0.0, %v562
        %564 = vmatmul.f32.gmra.mxu0 %v453
        %v565 = vpop.f32.mrf.mxu0
        %v566 = vadd.f32 0.0, %v565
        %567 = vmatmul.f32.gmra.mxu0 %v456
        %v568 = vpop.f32.mrf.mxu0
        %v569 = vadd.f32 0.0, %v568
        %570 = vmatmul.f32.gmra.mxu0 %v459
        %v571 = vpop.f32.mrf.mxu0
        %v572 = vadd.f32 0.0, %v571
        %573 = vmatmul.f32.gmra.mxu0 %v462
        %v574 = vpop.f32.mrf.mxu0
        %v575 = vadd.f32 0.0, %v574
        %576 = vmatmul.f32.gmra.mxu0 %v465
        %v577 = vpop.f32.mrf.mxu0
        %v578 = vadd.f32 0.0, %v577
        %579 = vmatmul.f32.gmra.mxu0 %v468
        %v580 = vpop.f32.mrf.mxu0
        %v581 = vadd.f32 0.0, %v580
        %582 = vmatmul.f32.gmra.mxu0 %v471
        %v583 = vpop.f32.mrf.mxu0
        %v584 = vadd.f32 0.0, %v583
        %585 = vmatmul.f32.gmra.mxu0 %v474
        %v586 = vpop.f32.mrf.mxu0
        %v587 = vadd.f32 0.0, %v586
        %588 = vmatmul.f32.gmra.mxu0 %v477
        %v589 = vpop.f32.mrf.mxu0
        %v590 = vadd.f32 0.0, %v589
        %591 = vmatmul.f32.gmra.mxu0 %v480
        %v592 = vpop.f32.mrf.mxu0
        %v593 = vadd.f32 0.0, %v592
        %594 = vmatmul.f32.gmra.mxu0 %v483
        %v595 = vpop.f32.mrf.mxu0
        %v596 = vadd.f32 0.0, %v595
        %597 = vmatmul.f32.gmra.mxu0 %v486
        %v598 = vpop.f32.mrf.mxu0
        %v599 = vadd.f32 0.0, %v598
        %600 = vmatmul.f32.gmra.mxu0 %v489
        %v601 = vpop.f32.mrf.mxu0
        %v602 = vadd.f32 0.0, %v601
        %603 = vmatmul.f32.gmra.mxu0 %v492
        %v604 = vpop.f32.mrf.mxu0
        %v605 = vadd.f32 0.0, %v604
        %606 = vmatmul.f32.gmra.mxu0 %v495
        %v607 = vpop.f32.mrf.mxu0
        %v608 = vadd.f32 0.0, %v607
        %609 = vdwg.mxu0
        %610 = vmatpush.msra.mxu0 0.0
        %611 = vmatpush.msra.mxu0 0.0
        %612 = vmatpush.msra.mxu0 0.0
        %613 = vmatpush.msra.mxu0 0.0
        %614 = vmatpush.msra.mxu0 0.0
        %615 = vmatpush.msra.mxu0 0.0
        %616 = vmatpush.msra.mxu0 0.0
        %617 = vmatpush.msra.mxu0 0.0
        %618 = vmatpush.msra.mxu0 0.0
        %619 = vmatpush.msra.mxu0 0.0
        %620 = vmatpush.msra.mxu0 0.0
        %621 = vmatpush.msra.mxu0 0.0
        %622 = vmatpush.msra.mxu0 0.0
        %623 = vmatpush.msra.mxu0 0.0
        %624 = vmatpush.msra.mxu0 0.0
        %625 = vmatpush.msra.mxu0 %v319
        %626 = vmatmul.f32.gmra.mxu0 %v402
        %v627 = vpop.f32.mrf.mxu0
        %v628 = vadd.f32 0.0, %v627
        %629 = vmatmul.f32.gmra.mxu0 %v405
        %v630 = vpop.f32.mrf.mxu0
        %v631 = vadd.f32 0.0, %v630
        %632 = vmatmul.f32.gmra.mxu0 %v408
        %v633 = vpop.f32.mrf.mxu0
        %v634 = vadd.f32 0.0, %v633
        %635 = vmatmul.f32.gmra.mxu0 %v411
        %v636 = vpop.f32.mrf.mxu0
        %v637 = vadd.f32 0.0, %v636
        %638 = vmatmul.f32.gmra.mxu0 %v414
        %v639 = vpop.f32.mrf.mxu0
        %v640 = vadd.f32 0.0, %v639
        %641 = vmatmul.f32.gmra.mxu0 %v417
        %v642 = vpop.f32.mrf.mxu0
        %v643 = vadd.f32 0.0, %v642
        %644 = vmatmul.f32.gmra.mxu0 %v420
        %v645 = vpop.f32.mrf.mxu0
        %v646 = vadd.f32 0.0, %v645
        %647 = vmatmul.f32.gmra.mxu0 %v423
        %v648 = vpop.f32.mrf.mxu0
        %v649 = vadd.f32 0.0, %v648
        %650 = vmatmul.f32.gmra.mxu0 %v426
        %v651 = vpop.f32.mrf.mxu0
        %v652 = vadd.f32 0.0, %v651
        %653 = vmatmul.f32.gmra.mxu0 %v429
        %v654 = vpop.f32.mrf.mxu0
        %v655 = vadd.f32 0.0, %v654
        %656 = vmatmul.f32.gmra.mxu0 %v432
        %v657 = vpop.f32.mrf.mxu0
        %v658 = vadd.f32 0.0, %v657
        %659 = vmatmul.f32.gmra.mxu0 %v435
        %v660 = vpop.f32.mrf.mxu0
        %v661 = vadd.f32 0.0, %v660
        %662 = vmatmul.f32.gmra.mxu0 %v438
        %v663 = vpop.f32.mrf.mxu0
        %v664 = vadd.f32 0.0, %v663
        %665 = vmatmul.f32.gmra.mxu0 %v441
        %v666 = vpop.f32.mrf.mxu0
        %v667 = vadd.f32 0.0, %v666
        %668 = vmatmul.f32.gmra.mxu0 %v444
        %v669 = vpop.f32.mrf.mxu0
        %v670 = vadd.f32 0.0, %v669
        %671 = vmatmul.f32.gmra.mxu0 %v447
        %v672 = vpop.f32.mrf.mxu0
        %v673 = vadd.f32 0.0, %v672
        %674 = vmatmul.f32.gmra.mxu0 %v450
        %v675 = vpop.f32.mrf.mxu0
        %v676 = vadd.f32 0.0, %v675
        %677 = vmatmul.f32.gmra.mxu0 %v453
        %v678 = vpop.f32.mrf.mxu0
        %v679 = vadd.f32 0.0, %v678
        %680 = vmatmul.f32.gmra.mxu0 %v456
        %v681 = vpop.f32.mrf.mxu0
        %v682 = vadd.f32 0.0, %v681
        %683 = vmatmul.f32.gmra.mxu0 %v459
        %v684 = vpop.f32.mrf.mxu0
        %v685 = vadd.f32 0.0, %v684
        %686 = vmatmul.f32.gmra.mxu0 %v462
        %v687 = vpop.f32.mrf.mxu0
        %v688 = vadd.f32 0.0, %v687
        %689 = vmatmul.f32.gmra.mxu0 %v465
        %v690 = vpop.f32.mrf.mxu0
        %v691 = vadd.f32 0.0, %v690
        %692 = vmatmul.f32.gmra.mxu0 %v468
        %v693 = vpop.f32.mrf.mxu0
        %v694 = vadd.f32 0.0, %v693
        %695 = vmatmul.f32.gmra.mxu0 %v471
        %v696 = vpop.f32.mrf.mxu0
        %v697 = vadd.f32 0.0, %v696
        %698 = vmatmul.f32.gmra.mxu0 %v474
        %v699 = vpop.f32.mrf.mxu0
        %v700 = vadd.f32 0.0, %v699
        %701 = vmatmul.f32.gmra.mxu0 %v477
        %v702 = vpop.f32.mrf.mxu0
        %v703 = vadd.f32 0.0, %v702
        %704 = vmatmul.f32.gmra.mxu0 %v480
        %v705 = vpop.f32.mrf.mxu0
        %v706 = vadd.f32 0.0, %v705
        %707 = vmatmul.f32.gmra.mxu0 %v483
        %v708 = vpop.f32.mrf.mxu0
        %v709 = vadd.f32 0.0, %v708
        %710 = vmatmul.f32.gmra.mxu0 %v486
        %v711 = vpop.f32.mrf.mxu0
        %v712 = vadd.f32 0.0, %v711
        %713 = vmatmul.f32.gmra.mxu0 %v489
        %v714 = vpop.f32.mrf.mxu0
        %v715 = vadd.f32 0.0, %v714
        %716 = vmatmul.f32.gmra.mxu0 %v492
        %v717 = vpop.f32.mrf.mxu0
        %v718 = vadd.f32 0.0, %v717
        %719 = vmatmul.f32.gmra.mxu0 %v495
        %v720 = vpop.f32.mrf.mxu0
        %v721 = vadd.f32 0.0, %v720
        %722 = vdwg.mxu0
        %v723 = vmax.f32 %v515, %v521
        %v724 = vmax.f32 %v518, %v524
        %v725 = vmax.f32 %v723, %v527
        %v726 = vmax.f32 %v724, %v530
        %v727 = vmax.f32 %v725, %v533
        %v728 = vmax.f32 %v726, %v536
        %v729 = vmax.f32 %v727, %v539
        %v730 = vmax.f32 %v728, %v542
        %v731 = vmax.f32 %v729, %v545
        %v732 = vmax.f32 %v730, %v548
        %v733 = vmax.f32 %v731, %v551
        %v734 = vmax.f32 %v732, %v554
        %v735 = vmax.f32 %v733, %v557
        %v736 = vmax.f32 %v734, %v560
        %v737 = vmax.f32 %v735, %v563
        %v738 = vmax.f32 %v736, %v566
        %v739 = vmax.f32 %v737, %v569
        %v740 = vmax.f32 %v738, %v572
        %v741 = vmax.f32 %v739, %v575
        %v742 = vmax.f32 %v740, %v578
        %v743 = vmax.f32 %v741, %v581
        %v744 = vmax.f32 %v742, %v584
        %v745 = vmax.f32 %v743, %v587
        %v746 = vmax.f32 %v744, %v590
        %v747 = vmax.f32 %v745, %v593
        %v748 = vmax.f32 %v746, %v596
        %v749 = vmax.f32 %v747, %v599
        %v750 = vmax.f32 %v748, %v602
        %v751 = vmax.f32 %v749, %v605
        %v752 = vmax.f32 %v750, %v608
        %v753 = vmax.f32 %v751, %v752
        %v754 = vrot.slane %v753, 4
        %v755 = vmax.f32 %v753, %v754
        %v756 = vrot.slane %v755, 2
        %v757 = vmax.f32 %v755, %v756
        %v758 = vrot.slane %v757, 1
        %v759 = vmax.f32 %v757, %v758
        %v760 = vmax.f32 %v628, %v634
        %v761 = vmax.f32 %v631, %v637
        %v762 = vmax.f32 %v760, %v640
        %v763 = vmax.f32 %v761, %v643
        %v764 = vmax.f32 %v762, %v646
        %v765 = vmax.f32 %v763, %v649
        %v766 = vmax.f32 %v764, %v652
        %v767 = vmax.f32 %v765, %v655
        %v768 = vmax.f32 %v766, %v658
        %v769 = vmax.f32 %v767, %v661
        %v770 = vmax.f32 %v768, %v664
        %v771 = vmax.f32 %v769, %v667
        %v772 = vmax.f32 %v770, %v670
        %v773 = vmax.f32 %v771, %v673
        %v774 = vmax.f32 %v772, %v676
        %v775 = vmax.f32 %v773, %v679
        %v776 = vmax.f32 %v774, %v682
        %v777 = vmax.f32 %v775, %v685
        %v778 = vmax.f32 %v776, %v688
        %v779 = vmax.f32 %v777, %v691
        %v780 = vmax.f32 %v778, %v694
        %v781 = vmax.f32 %v779, %v697
        %v782 = vmax.f32 %v780, %v700
        %v783 = vmax.f32 %v781, %v703
        %v784 = vmax.f32 %v782, %v706
        %v785 = vmax.f32 %v783, %v709
        %v786 = vmax.f32 %v784, %v712
        %v787 = vmax.f32 %v785, %v715
        %v788 = vmax.f32 %v786, %v718
        %v789 = vmax.f32 %v787, %v721
        %v790 = vmax.f32 %v788, %v789
        %v791 = vrot.slane %v790, 4
        %v792 = vmax.f32 %v790, %v791
        %v793 = vrot.slane %v792, 2
        %v794 = vmax.f32 %v792, %v793
        %v795 = vrot.slane %v794, 1
        %v796 = vmax.f32 %v794, %v795
        %v797 = vsub.f32 %v515, %v759
        %v798 = vsub.f32 %v628, %v796
        %v799 = vsub.f32 %v518, %v759
        %v800 = vsub.f32 %v631, %v796
        %v801 = vsub.f32 %v521, %v759
        %v802 = vsub.f32 %v634, %v796
        %v803 = vsub.f32 %v524, %v759
        %v804 = vsub.f32 %v637, %v796
        %v805 = vsub.f32 %v527, %v759
        %v806 = vsub.f32 %v640, %v796
        %v807 = vsub.f32 %v530, %v759
        %v808 = vsub.f32 %v643, %v796
        %v809 = vsub.f32 %v533, %v759
        %v810 = vsub.f32 %v646, %v796
        %v811 = vsub.f32 %v536, %v759
        %v812 = vsub.f32 %v649, %v796
        %v813 = vsub.f32 %v539, %v759
        %v814 = vsub.f32 %v652, %v796
        %v815 = vsub.f32 %v542, %v759
        %v816 = vsub.f32 %v655, %v796
        %v817 = vsub.f32 %v545, %v759
        %v818 = vsub.f32 %v658, %v796
        %v819 = vsub.f32 %v548, %v759
        %v820 = vsub.f32 %v661, %v796
        %v821 = vsub.f32 %v551, %v759
        %v822 = vsub.f32 %v664, %v796
        %v823 = vsub.f32 %v554, %v759
        %v824 = vsub.f32 %v667, %v796
        %v825 = vsub.f32 %v557, %v759
        %v826 = vsub.f32 %v670, %v796
        %v827 = vsub.f32 %v560, %v759
        %v828 = vsub.f32 %v673, %v796
        %v829 = vsub.f32 %v563, %v759
        %v830 = vsub.f32 %v676, %v796
        %v831 = vsub.f32 %v566, %v759
        %v832 = vsub.f32 %v679, %v796
        %v833 = vsub.f32 %v569, %v759
        %v834 = vsub.f32 %v682, %v796
        %v835 = vsub.f32 %v572, %v759
        %v836 = vsub.f32 %v685, %v796
        %v837 = vsub.f32 %v575, %v759
        %v838 = vsub.f32 %v688, %v796
        %v839 = vsub.f32 %v578, %v759
        %v840 = vsub.f32 %v691, %v796
        %v841 = vsub.f32 %v581, %v759
        %v842 = vsub.f32 %v694, %v796
        %v843 = vsub.f32 %v584, %v759
        %v844 = vsub.f32 %v697, %v796
        %v845 = vsub.f32 %v587, %v759
        %v846 = vsub.f32 %v700, %v796
        %v847 = vsub.f32 %v590, %v759
        %v848 = vsub.f32 %v703, %v796
        %v849 = vsub.f32 %v593, %v759
        %v850 = vsub.f32 %v706, %v796
        %v851 = vsub.f32 %v596, %v759
        %v852 = vsub.f32 %v709, %v796
        %v853 = vsub.f32 %v599, %v759
        %v854 = vsub.f32 %v712, %v796
        %v855 = vsub.f32 %v602, %v759
        %v856 = vsub.f32 %v715, %v796
        %v857 = vsub.f32 %v605, %v759
        %v858 = vsub.f32 %v718, %v796
        %v859 = vsub.f32 %v608, %v759
        %v860 = vsub.f32 %v721, %v796
        %v861 = vmul.f32 %v797, 1.442695
        %v862 = vpow.pop %v861
        %v863 = vmul.f32 %v798, 1.442695
        %v864 = vpow.pop %v863
        %v865 = vmul.f32 %v799, 1.442695
        %v866 = vpow.pop %v865
        %v867 = vmul.f32 %v800, 1.442695
        %v868 = vpow.pop %v867
        %v869 = vmul.f32 %v801, 1.442695
        %v870 = vpow.pop %v869
        %v871 = vmul.f32 %v802, 1.442695
        %v872 = vpow.pop %v871
        %v873 = vmul.f32 %v803, 1.442695
        %v874 = vpow.pop %v873
        %v875 = vmul.f32 %v804, 1.442695
        %v876 = vpow.pop %v875
        %v877 = vmul.f32 %v805, 1.442695
        %v878 = vpow.pop %v877
        %v879 = vmul.f32 %v806, 1.442695
        %v880 = vpow.pop %v879
        %v881 = vmul.f32 %v807, 1.442695
        %v882 = vpow.pop %v881
        %v883 = vmul.f32 %v808, 1.442695
        %v884 = vpow.pop %v883
        %v885 = vmul.f32 %v809, 1.442695
        %v886 = vpow.pop %v885
        %v887 = vmul.f32 %v810, 1.442695
        %v888 = vpow.pop %v887
        %v889 = vmul.f32 %v811, 1.442695
        %v890 = vpow.pop %v889
        %v891 = vmul.f32 %v812, 1.442695
        %v892 = vpow.pop %v891
        %v893 = vmul.f32 %v813, 1.442695
        %v894 = vpow.pop %v893
        %v895 = vmul.f32 %v814, 1.442695
        %v896 = vpow.pop %v895
        %v897 = vmul.f32 %v815, 1.442695
        %v898 = vpow.pop %v897
        %v899 = vmul.f32 %v816, 1.442695
        %v900 = vpow.pop %v899
        %v901 = vmul.f32 %v817, 1.442695
        %v902 = vpow.pop %v901
        %v903 = vmul.f32 %v818, 1.442695
        %v904 = vpow.pop %v903
        %v905 = vmul.f32 %v819, 1.442695
        %v906 = vpow.pop %v905
        %v907 = vmul.f32 %v820, 1.442695
        %v908 = vpow.pop %v907
        %v909 = vmul.f32 %v821, 1.442695
        %v910 = vpow.pop %v909
        %v911 = vmul.f32 %v822, 1.442695
        %v912 = vpow.pop %v911
        %v913 = vmul.f32 %v823, 1.442695
        %v914 = vpow.pop %v913
        %v915 = vmul.f32 %v824, 1.442695
        %v916 = vpow.pop %v915
        %v917 = vmul.f32 %v825, 1.442695
        %v918 = vpow.pop %v917
        %v919 = vmul.f32 %v826, 1.442695
        %v920 = vpow.pop %v919
        %v921 = vmul.f32 %v827, 1.442695
        %v922 = vpow.pop %v921
        %v923 = vmul.f32 %v828, 1.442695
        %v924 = vpow.pop %v923
        %v925 = vmul.f32 %v829, 1.442695
        %v926 = vpow.pop %v925
        %v927 = vmul.f32 %v830, 1.442695
        %v928 = vpow.pop %v927
        %v929 = vmul.f32 %v831, 1.442695
        %v930 = vpow.pop %v929
        %v931 = vmul.f32 %v832, 1.442695
        %v932 = vpow.pop %v931
        %v933 = vmul.f32 %v833, 1.442695
        %v934 = vpow.pop %v933
        %v935 = vmul.f32 %v834, 1.442695
        %v936 = vpow.pop %v935
        %v937 = vmul.f32 %v835, 1.442695
        %v938 = vpow.pop %v937
        %v939 = vmul.f32 %v836, 1.442695
        %v940 = vpow.pop %v939
        %v941 = vmul.f32 %v837, 1.442695
        %v942 = vpow.pop %v941
        %v943 = vmul.f32 %v838, 1.442695
        %v944 = vpow.pop %v943
        %v945 = vmul.f32 %v839, 1.442695
        %v946 = vpow.pop %v945
        %v947 = vmul.f32 %v840, 1.442695
        %v948 = vpow.pop %v947
        %v949 = vmul.f32 %v841, 1.442695
        %v950 = vpow.pop %v949
        %v951 = vmul.f32 %v842, 1.442695
        %v952 = vpow.pop %v951
        %v953 = vmul.f32 %v843, 1.442695
        %v954 = vpow.pop %v953
        %v955 = vmul.f32 %v844, 1.442695
        %v956 = vpow.pop %v955
        %v957 = vmul.f32 %v845, 1.442695
        %v958 = vpow.pop %v957
        %v959 = vmul.f32 %v846, 1.442695
        %v960 = vpow.pop %v959
        %v961 = vmul.f32 %v847, 1.442695
        %v962 = vpow.pop %v961
        %v963 = vmul.f32 %v848, 1.442695
        %v964 = vpow.pop %v963
        %v965 = vmul.f32 %v849, 1.442695
        %v966 = vpow.pop %v965
        %v967 = vmul.f32 %v850, 1.442695
        %v968 = vpow.pop %v967
        %v969 = vmul.f32 %v851, 1.442695
        %v970 = vpow.pop %v969
        %v971 = vmul.f32 %v852, 1.442695
        %v972 = vpow.pop %v971
        %v973 = vmul.f32 %v853, 1.442695
        %v974 = vpow.pop %v973
        %v975 = vmul.f32 %v854, 1.442695
        %v976 = vpow.pop %v975
        %v977 = vmul.f32 %v855, 1.442695
        %v978 = vpow.pop %v977
        %v979 = vmul.f32 %v856, 1.442695
        %v980 = vpow.pop %v979
        %v981 = vmul.f32 %v857, 1.442695
        %v982 = vpow.pop %v981
        %v983 = vmul.f32 %v858, 1.442695
        %v984 = vpow.pop %v983
        %v985 = vmul.f32 %v859, 1.442695
        %v986 = vpow.pop %v985
        %v987 = vmul.f32 %v860, 1.442695
        %v988 = vpow.pop %v987
        %v989 = vadd.f32 %v862, %v866
        %v990 = vadd.f32 %v989, %v870
        %v991 = vadd.f32 %v990, %v874
        %v992 = vadd.f32 %v991, %v878
        %v993 = vadd.f32 %v992, %v882
        %v994 = vadd.f32 %v993, %v886
        %v995 = vadd.f32 %v994, %v890
        %v996 = vadd.f32 %v995, %v894
        %v997 = vadd.f32 %v996, %v898
        %v998 = vadd.f32 %v997, %v902
        %v999 = vadd.f32 %v998, %v906
        %v1000 = vadd.f32 %v999, %v910
        %v1001 = vadd.f32 %v1000, %v914
        %v1002 = vadd.f32 %v1001, %v918
        %v1003 = vadd.f32 %v1002, %v922
        %v1004 = vadd.f32 %v1003, %v926
        %v1005 = vadd.f32 %v1004, %v930
        %v1006 = vadd.f32 %v1005, %v934
        %v1007 = vadd.f32 %v1006, %v938
        %v1008 = vadd.f32 %v1007, %v942
        %v1009 = vadd.f32 %v1008, %v946
        %v1010 = vadd.f32 %v1009, %v950
        %v1011 = vadd.f32 %v1010, %v954
        %v1012 = vadd.f32 %v1011, %v958
        %v1013 = vadd.f32 %v1012, %v962
        %v1014 = vadd.f32 %v1013, %v966
        %v1015 = vadd.f32 %v1014, %v970
        %v1016 = vadd.f32 %v1015, %v974
        %v1017 = vadd.f32 %v1016, %v978
        %v1018 = vadd.f32 %v1017, %v982
        %v1019 = vadd.f32 %v1018, %v986
        %v1020 = vrot.slane %v1019, 4
        %v1021 = vadd.f32 %v1019, %v1020
        %v1022 = vrot.slane %v1021, 2
        %v1023 = vadd.f32 %v1021, %v1022
        %v1024 = vrot.slane %v1023, 1
        %v1025 = vadd.f32 %v1023, %v1024
        %v1026 = vadd.f32 %v864, %v868
        %v1027 = vadd.f32 %v1026, %v872
        %v1028 = vadd.f32 %v1027, %v876
        %v1029 = vadd.f32 %v1028, %v880
        %v1030 = vadd.f32 %v1029, %v884
        %v1031 = vadd.f32 %v1030, %v888
        %v1032 = vadd.f32 %v1031, %v892
        %v1033 = vadd.f32 %v1032, %v896
        %v1034 = vadd.f32 %v1033, %v900
        %v1035 = vadd.f32 %v1034, %v904
        %v1036 = vadd.f32 %v1035, %v908
        %v1037 = vadd.f32 %v1036, %v912
        %v1038 = vadd.f32 %v1037, %v916
        %v1039 = vadd.f32 %v1038, %v920
        %v1040 = vadd.f32 %v1039, %v924
        %v1041 = vadd.f32 %v1040, %v928
        %v1042 = vadd.f32 %v1041, %v932
        %v1043 = vadd.f32 %v1042, %v936
        %v1044 = vadd.f32 %v1043, %v940
        %v1045 = vadd.f32 %v1044, %v944
        %v1046 = vadd.f32 %v1045, %v948
        %v1047 = vadd.f32 %v1046, %v952
        %v1048 = vadd.f32 %v1047, %v956
        %v1049 = vadd.f32 %v1048, %v960
        %v1050 = vadd.f32 %v1049, %v964
        %v1051 = vadd.f32 %v1050, %v968
        %v1052 = vadd.f32 %v1051, %v972
        %v1053 = vadd.f32 %v1052, %v976
        %v1054 = vadd.f32 %v1053, %v980
        %v1055 = vadd.f32 %v1054, %v984
        %v1056 = vadd.f32 %v1055, %v988
        %v1057 = vrot.slane %v1056, 4
        %v1058 = vadd.f32 %v1056, %v1057
        %v1059 = vrot.slane %v1058, 2
        %v1060 = vadd.f32 %v1058, %v1059
        %v1061 = vrot.slane %v1060, 1
        %v1062 = vadd.f32 %v1060, %v1061
        %1063 = vmatpush.msra.mxu0 %v922
        %1064 = vmatpush.msra.mxu0 %v918
        %1065 = vmatpush.msra.mxu0 %v914
        %1066 = vmatpush.msra.mxu0 %v910
        %1067 = vmatpush.msra.mxu0 %v906
        %1068 = vmatpush.msra.mxu0 %v902
        %1069 = vmatpush.msra.mxu0 %v898
        %1070 = vmatpush.msra.mxu0 %v894
        %1071 = vmatpush.msra.mxu0 %v890
        %1072 = vmatpush.msra.mxu0 %v886
        %1073 = vmatpush.msra.mxu0 %v882
        %1074 = vmatpush.msra.mxu0 %v878
        %1075 = vmatpush.msra.mxu0 %v874
        %1076 = vmatpush.msra.mxu0 %v870
        %1077 = vmatpush.msra.mxu0 %v866
        %1078 = vmatpush.msra.mxu0 %v862
        %1079 = vmatmul.f32.gmra.mxu0 %v290
        %v1080 = vpop.f32.mrf.mxu0
        %v1081 = vadd.f32 0.0, %v1080
        %1082 = vmatmul.f32.gmra.mxu0 %v293
        %v1083 = vpop.f32.mrf.mxu0
        %v1084 = vadd.f32 0.0, %v1083
        %1085 = vmatmul.f32.gmra.mxu0 %v296
        %v1086 = vpop.f32.mrf.mxu0
        %v1087 = vadd.f32 0.0, %v1086
        %1088 = vmatmul.f32.gmra.mxu0 %v299
        %v1089 = vpop.f32.mrf.mxu0
        %v1090 = vadd.f32 0.0, %v1089
        %1091 = vdwg.mxu0
        %1092 = vmatpush.msra.mxu0 %v986
        %1093 = vmatpush.msra.mxu0 %v982
        %1094 = vmatpush.msra.mxu0 %v978
        %1095 = vmatpush.msra.mxu0 %v974
        %1096 = vmatpush.msra.mxu0 %v970
        %1097 = vmatpush.msra.mxu0 %v966
        %1098 = vmatpush.msra.mxu0 %v962
        %1099 = vmatpush.msra.mxu0 %v958
        %1100 = vmatpush.msra.mxu0 %v954
        %1101 = vmatpush.msra.mxu0 %v950
        %1102 = vmatpush.msra.mxu0 %v946
        %1103 = vmatpush.msra.mxu0 %v942
        %1104 = vmatpush.msra.mxu0 %v938
        %1105 = vmatpush.msra.mxu0 %v934
        %1106 = vmatpush.msra.mxu0 %v930
        %1107 = vmatpush.msra.mxu0 %v926
        %1108 = vmatmul.f32.gmra.mxu0 %v325
        %v1109 = vpop.f32.mrf.mxu0
        %v1110 = vadd.f32 %v1081, %v1109
        %1111 = vmatmul.f32.gmra.mxu0 %v328
        %v1112 = vpop.f32.mrf.mxu0
        %v1113 = vadd.f32 %v1084, %v1112
        %1114 = vmatmul.f32.gmra.mxu0 %v331
        %v1115 = vpop.f32.mrf.mxu0
        %v1116 = vadd.f32 %v1087, %v1115
        %1117 = vmatmul.f32.gmra.mxu0 %v334
        %v1118 = vpop.f32.mrf.mxu0
        %v1119 = vadd.f32 %v1090, %v1118
        %1120 = vdwg.mxu0
        %1121 = vmatpush.msra.mxu0 %v924
        %1122 = vmatpush.msra.mxu0 %v920
        %1123 = vmatpush.msra.mxu0 %v916
        %1124 = vmatpush.msra.mxu0 %v912
        %1125 = vmatpush.msra.mxu0 %v908
        %1126 = vmatpush.msra.mxu0 %v904
        %1127 = vmatpush.msra.mxu0 %v900
        %1128 = vmatpush.msra.mxu0 %v896
        %1129 = vmatpush.msra.mxu0 %v892
        %1130 = vmatpush.msra.mxu0 %v888
        %1131 = vmatpush.msra.mxu0 %v884
        %1132 = vmatpush.msra.mxu0 %v880
        %1133 = vmatpush.msra.mxu0 %v876
        %1134 = vmatpush.msra.mxu0 %v872
        %1135 = vmatpush.msra.mxu0 %v868
        %1136 = vmatpush.msra.mxu0 %v864
        %1137 = vmatmul.f32.gmra.mxu0 %v290
        %v1138 = vpop.f32.mrf.mxu0
        %v1139 = vadd.f32 0.0, %v1138
        %1140 = vmatmul.f32.gmra.mxu0 %v293
        %v1141 = vpop.f32.mrf.mxu0
        %v1142 = vadd.f32 0.0, %v1141
        %1143 = vmatmul.f32.gmra.mxu0 %v296
        %v1144 = vpop.f32.mrf.mxu0
        %v1145 = vadd.f32 0.0, %v1144
        %1146 = vmatmul.f32.gmra.mxu0 %v299
        %v1147 = vpop.f32.mrf.mxu0
        %v1148 = vadd.f32 0.0, %v1147
        %1149 = vdwg.mxu0
        %1150 = vmatpush.msra.mxu0 %v988
        %1151 = vmatpush.msra.mxu0 %v984
        %1152 = vmatpush.msra.mxu0 %v980
        %1153 = vmatpush.msra.mxu0 %v976
        %1154 = vmatpush.msra.mxu0 %v972
        %1155 = vmatpush.msra.mxu0 %v968
        %1156 = vmatpush.msra.mxu0 %v964
        %1157 = vmatpush.msra.mxu0 %v960
        %1158 = vmatpush.msra.mxu0 %v956
        %1159 = vmatpush.msra.mxu0 %v952
        %1160 = vmatpush.msra.mxu0 %v948
        %1161 = vmatpush.msra.mxu0 %v944
        %1162 = vmatpush.msra.mxu0 %v940
        %1163 = vmatpush.msra.mxu0 %v936
        %1164 = vmatpush.msra.mxu0 %v932
        %1165 = vmatpush.msra.mxu0 %v928
        %1166 = vmatmul.f32.gmra.mxu0 %v325
        %v1167 = vpop.f32.mrf.mxu0
        %v1168 = vadd.f32 %v1139, %v1167
        %1169 = vmatmul.f32.gmra.mxu0 %v328
        %v1170 = vpop.f32.mrf.mxu0
        %v1171 = vadd.f32 %v1142, %v1170
        %1172 = vmatmul.f32.gmra.mxu0 %v331
        %v1173 = vpop.f32.mrf.mxu0
        %v1174 = vadd.f32 %v1145, %v1173
        %1175 = vmatmul.f32.gmra.mxu0 %v334
        %v1176 = vpop.f32.mrf.mxu0
        %v1177 = vadd.f32 %v1148, %v1176
        %1178 = vdwg.mxu0
        %s1179 = sld [smem:[#allocation2]]
        %v1180 = vrcp.pop %v1025
        %v1181 = vrcp.pop %v1062
        %v1182 = vstv %s1179
        %v1183 = vmul.f32 %v1182, %v1180
        %v1184 = vmul.f32 %v1182, %v1181
        %v1185 = vmul.f32 %v1110, %v1183
        %v1186 = vmul.f32 %v1168, %v1184
        %v1187 = vmul.f32 %v1113, %v1183
        %v1188 = vmul.f32 %v1171, %v1184
        %v1189 = vmul.f32 %v1116, %v1183
        %v1190 = vmul.f32 %v1174, %v1184
        %v1191 = vmul.f32 %v1119, %v1183
        %v1192 = vmul.f32 %v1177, %v1184
        %v1193 = vadd.f32 %v1185, %v197
        %v1194 = vadd.f32 %v1186, %v198
        %v1195 = vadd.f32 %v1187, %v199
        %v1196 = vadd.f32 %v1188, %v200
        %v1197 = vadd.f32 %v1189, %v201
        %v1198 = vadd.f32 %v1190, %v202
        %v1199 = vadd.f32 %v1191, %v203
        %v1200 = vadd.f32 %v1192, %v204
        %1201 = vst [vmem:[%s191] sm:$0xff] %v1193
        %1202 = vst [vmem:[%s191 + $0x8] sm:$0xff] %v1194
        %1203 = vst [vmem:[%s191 + $0x10] sm:$0xff] %v1195
        %1204 = vst [vmem:[%s191 + $0x18] sm:$0xff] %v1196
        %1205 = vst [vmem:[%s191 + $0x20] sm:$0xff] %v1197
        %1206 = vst [vmem:[%s191 + $0x28] sm:$0xff] %v1198
        %1207 = vst [vmem:[%s191 + $0x30] sm:$0xff] %v1199
        %1208 = vst [vmem:[%s191 + $0x38] sm:$0xff] %v1200
        %s1209 = sand.u32 %s116, 1
        %s1210 = scalar_lea.sflag [#allocation4], %s1209
        %s1211 = sand.u32 %s116, 1
        %s1212 = smul.addr %s1211, 64
        %s1213 = scalar_lea.vmem [#allocation3], %s1212
        // Predicated region
        $region37: #{tpu_custom_call.1} parent=35 // pred_check
          %p1214 = pneg %p126
        $region38: #{tpu_custom_call.1} parent=35 // pred_check_branch
          %1216 = sbr.rel (%p1214) target = $region40
        $region39: #{tpu_custom_call.1} parent=35 // pred_region
          %1218 = vsyncadd %s1210, 0
          %s1219 = smul.addr %s19, 8
          %s1220 = smul.addr %s1219, 8
          %s1221 = scalar_lea.hbm %s4, %s1220
          %s1222 = sshll.u32 %s1213, 4
          %s1223 = int_to_ptr.vmem [resolvable:$true] %s1222
          %s1224 = sshll.u32 %s1221, 4
          %s1225 = int_to_ptr.hbm [resolvable:$true] %s1224
          %1230 = dma.vmem_to_hbm [thread:$0]  %s1223, 1024, %s1225, %s1210, 256, 256, 16
        $region40: #{tpu_custom_call.1} parent=35 // pred_fallthru
          _
      $region36: #{tpu_custom_call.1} parent=5 // pred_fallthru
        _
      %p1231 = scmp.le.s32.totalorder 2, %s14
      // Predicated region
      $region41: #{tpu_custom_call.1} parent=5 // pred_check
        %p1232 = pneg %p1231
      $region42: #{tpu_custom_call.1} parent=5 // pred_check_branch
        %1234 = sbr.rel (%p1232) target = $region44
      $region43: #{tpu_custom_call.1} parent=5 // pred_region
        %s1235 = ssub.s32 %s14, 2
        // Predicated region
        $region45: #{tpu_custom_call.1} parent=43 // pred_check
          %p1236 = pneg %p132
        $region46: #{tpu_custom_call.1} parent=43 // pred_check_branch
          %1238 = sbr.rel (%p1236) target = $region48
        $region47: #{tpu_custom_call.1} parent=43 // pred_region
          %s1239 = sand.u32 %s117, 1
          %s1240 = scalar_lea.sflag [#allocation4], %s1239
          %s1241 = sand.u32 %s117, 1
          %s1242 = smul.addr %s1241, 64
          %s1243 = scalar_lea.vmem [#allocation3], %s1242
          %1245 = dma.done %s1240, 1024
        $region48: #{tpu_custom_call.1} parent=43 // pred_fallthru
          _
      $region44: #{tpu_custom_call.1} parent=5 // pred_fallthru
        _
    $region6: #{tpu_custom_call.1} parent=1 // loop_footer
      %s18 = sadd.s32 1, %s14
    $region7: #{tpu_custom_call.1} parent=1 // loop_footer_branch
      %13 = sbr.rel target = $region3
    $region8: #{tpu_custom_call.1} parent=1 // loop_exit
      _
    %1246 = vsyncpa [#allocation4], 1
    %s1247 = scalar_lea.sflag [#allocation4], 1
    %1248 = vsyncpa %s1247, 1

</llo_original>
